<compile_context>
chip_gen: v6e
topology: v6e:2x2x1
jax: 0.10.0
libtpu: 0.0.40
codegen_flags: <defaults>
</compile_context>

<pallas_src>
import functools

import jax
import jax.numpy as jnp
from jax.experimental import pallas as pl
from jax.experimental.pallas import tpu as pltpu


def _round_up(v, m):
    return (v + m - 1) // m * m


def _sage_fused_kernel(a_ref, x_ref, w_ref, b_ref, o_ref, *, num_layers):
    """All SAGE layers fused; A resident in VMEM for the whole launch.

    a_ref: (Np, Np)      bf16   row-normalized adjacency
    x_ref: (Np, Cp)      bf16   padded input features
    w_ref: (L, 2*Cp, Cp) bf16   per-layer [W_l; W_r] stacked along rows
    b_ref: (L, 1, Cp)    f32    per-layer bias (padded)
    o_ref: (Np, Cp)      f32    padded output of the last layer
    """
    a = a_ref[...]                      # (Np, Np) bf16, loaded once
    h = x_ref[...]                      # (Np, Cp) bf16
    for layer in range(num_layers):     # static unroll (3 layers)
        # Mean aggregation on the MXU, f32 accumulation.
        agg = jnp.dot(a, h, preferred_element_type=jnp.float32)
        # Single wide-K projection: [agg, h] @ [W_l; W_r]  -> (Np, Cp)
        cat = jnp.concatenate([agg.astype(jnp.bfloat16), h], axis=-1)
        out = jnp.dot(cat, w_ref[layer], preferred_element_type=jnp.float32)
        out = out + b_ref[layer]        # (1, Cp) broadcast, f32 epilogue
        if layer != num_layers - 1:
            # ReLU then cast back to bf16 for the next layer's MXU inputs.
            # F.dropout(p=0.5, training=False) -> identity (eval mode).
            h = jnp.maximum(out, 0.0).astype(jnp.bfloat16)
        else:
            o_ref[...] = out.astype(o_ref.dtype)


def build_mean_adjacency(edge_index, num_nodes):
    """Dense row-normalized adjacency: A[dst, src] = 1/deg_in(dst). Plain JAX glue."""
    src = edge_index[0]
    dst = edge_index[1]
    a = jnp.zeros((num_nodes, num_nodes), dtype=jnp.float32)
    a = a.at[dst, src].add(1.0)
    deg = jnp.sum(a, axis=1, keepdims=True)
    return a / jnp.maximum(deg, 1.0)


def init_sage_params(key, in_channels, hidden_channels, out_channels, num_layers):
    """Glorot-uniform init matching SAGEConv parameter shapes."""
    dims = [in_channels] + [hidden_channels] * (num_layers - 1) + [out_channels]
    params = []
    for layer in range(num_layers):
        c_in, c_out = dims[layer], dims[layer + 1]
        key, k1, k2 = jax.random.split(key, 3)
        limit = jnp.sqrt(6.0 / (c_in + c_out))
        w_l = jax.random.uniform(k1, (c_in, c_out), jnp.float32, -limit, limit)
        w_r = jax.random.uniform(k2, (c_in, c_out), jnp.float32, -limit, limit)
        b = jnp.zeros((1, c_out), jnp.float32)
        params.append((w_l, w_r, b))
    return params


def sage_forward(x, edge_index, params):
    """Full SAGE forward: one fused pallas_call over all layers."""
    num_layers = len(params)
    n, c_in = x.shape
    c_out_final = params[-1][0].shape[1]

    all_dims = [c_in] + [p[0].shape[1] for p in params]
    cp = _round_up(max(all_dims), 128)      # common lane-dense channel width
    np_rows = _round_up(max(n, 8), 8)       # sublane-aligned row count

    # Adjacency built in f32 (keeps 1/deg precision), cast bf16 at the boundary.
    a = build_mean_adjacency(edge_index, n)
    a = jnp.pad(a, ((0, np_rows - n), (0, np_rows - n))).astype(jnp.bfloat16)
    x_p = jnp.pad(x, ((0, np_rows - n), (0, cp - c_in))).astype(jnp.bfloat16)

    # Pad + stack per-layer weights as [W_l; W_r] (2Cp, Cp) and biases (1, Cp).
    w_stack, b_stack = [], []
    for (w_l, w_r, b) in params:
        ci, co = w_l.shape
        w_l_p = jnp.pad(w_l, ((0, cp - ci), (0, cp - co)))
        w_r_p = jnp.pad(w_r, ((0, cp - ci), (0, cp - co)))
        w_stack.append(jnp.concatenate([w_l_p, w_r_p], axis=0))
        b_stack.append(jnp.pad(jnp.reshape(b, (1, -1)), ((0, 0), (0, cp - co))))
    w_all = jnp.stack(w_stack).astype(jnp.bfloat16)   # (L, 2Cp, Cp)
    b_all = jnp.stack(b_stack).astype(jnp.float32)    # (L, 1, Cp)

    kernel = functools.partial(_sage_fused_kernel, num_layers=num_layers)
    out_p = pl.pallas_call(
        kernel,
        out_shape=jax.ShapeDtypeStruct((np_rows, cp), jnp.float32),
        grid=(1,),
        in_specs=[
            pl.BlockSpec(a.shape, lambda i: (0, 0)),
            pl.BlockSpec(x_p.shape, lambda i: (0, 0)),
            pl.BlockSpec(w_all.shape, lambda i: (0, 0, 0)),
            pl.BlockSpec(b_all.shape, lambda i: (0, 0, 0)),
        ],
        out_specs=pl.BlockSpec((np_rows, cp), lambda i: (0, 0)),
        compiler_params=pltpu.CompilerParams(
            dimension_semantics=("arbitrary",),
        ),
    )(a, x_p, w_all, b_all)

    return out_p[:n, :c_out_final]


def sage_forward_ref(x, edge_index, params):
    """Pure-JAX f32 reference for correctness checking."""
    a = build_mean_adjacency(edge_index, x.shape[0])
    num_layers = len(params)
    for i, (w_l, w_r, b) in enumerate(params):
        x = (a @ x) @ w_l + x @ w_r + jnp.reshape(b, (1, -1))
        if i != num_layers - 1:
            x = jnp.maximum(x, 0.0)
    return x


if __name__ == "__main__":
    key = jax.random.PRNGKey(0)
    k_x, k_e, k_p = jax.random.split(key, 3)

    # Small synthetic graph consistent with the module's forward:
    num_nodes = 64
    num_edges = 256
    in_channels = 32
    hidden_channels = 64
    out_channels = 16
    num_layers = 3

    x = jax.random.normal(k_x, (num_nodes, in_channels), jnp.float32)
    edge_index = jax.random.randint(k_e, (2, num_edges), 0, num_nodes, jnp.int32)

    params = init_sage_params(k_p, in_channels, hidden_channels, out_channels,
                              num_layers)

    out = sage_forward(x, edge_index, params)
    out = jax.block_until_ready(out)
    assert out.shape == (num_nodes, out_channels)

    # Loose check vs f32 reference (bf16 matmul inputs, f32 accumulation).
    ref = sage_forward_ref(x, edge_index, params)
    err = float(jnp.max(jnp.abs(out - ref)))
    scale = float(jnp.max(jnp.abs(ref)))
    assert err <= 0.05 * scale + 0.05, (err, scale)

    print("KERNEL_OK")
</pallas_src>

<mosaic_0001>
module attributes {stable_mosaic.version = 11 : i64} {
  func.func @_sage_fused_kernel(%arg0: i32, %arg1: memref<64x64xbf16, #tpu.memory_space<vmem>>, %arg2: memref<64x128xbf16, #tpu.memory_space<vmem>>, %arg3: memref<3x256x128xbf16, #tpu.memory_space<vmem>>, %arg4: memref<3x1x128xf32, #tpu.memory_space<vmem>>, %arg5: memref<64x128xf32, #tpu.memory_space<vmem>>) attributes {dimension_semantics = [#tpu.dimension_semantics<arbitrary>], iteration_bounds = array<i64: 1>, scalar_prefetch = 0 : i64, scratch_operands = 0 : i64, tpu.core_type = #tpu.core_type<tc>, window_params = [{pipeline_mode = #tpu.pipeline_mode<synchronous>, transform_indices = @transform_0, window_bounds = array<i64: 64, 64>}, {pipeline_mode = #tpu.pipeline_mode<synchronous>, transform_indices = @transform_1, window_bounds = array<i64: 64, 128>}, {pipeline_mode = #tpu.pipeline_mode<synchronous>, transform_indices = @transform_2, window_bounds = array<i64: 3, 256, 128>}, {pipeline_mode = #tpu.pipeline_mode<synchronous>, transform_indices = @transform_3, window_bounds = array<i64: 3, 1, 128>}, {pipeline_mode = #tpu.pipeline_mode<synchronous>, transform_indices = @transform_4, window_bounds = array<i64: 64, 128>}]} {
    %c0 = arith.constant 0 : index
    %c0_0 = arith.constant 0 : index
    %0 = vector.load %arg1[%c0, %c0_0] : memref<64x64xbf16, #tpu.memory_space<vmem>>, vector<64x64xbf16>
    %c0_1 = arith.constant 0 : index
    %c0_2 = arith.constant 0 : index
    %1 = vector.load %arg2[%c0_1, %c0_2] : memref<64x128xbf16, #tpu.memory_space<vmem>>, vector<64x128xbf16>
    %cst = arith.constant dense<0.000000e+00> : vector<64x128xf32>
    %2 = tpu.matmul %0, %1, %cst {dimension_numbers = #tpu.dot_dimension_numbers<[1], [0], [0], [1], [0, 0, 1, 1], [], []>} : vector<64x64xbf16>, vector<64x128xbf16>, vector<64x128xf32> -> vector<64x128xf32>
    %3 = arith.truncf %2 : vector<64x128xf32> to vector<64x128xbf16>
    %4 = tpu.concatenate %3, %1 in 1 : vector<64x128xbf16>, vector<64x128xbf16> -> vector<64x256xbf16>
    %c0_3 = arith.constant 0 : index
    %c0_4 = arith.constant 0 : index
    %c0_5 = arith.constant 0 : index
    %5 = vector.load %arg3[%c0_3, %c0_4, %c0_5] : memref<3x256x128xbf16, #tpu.memory_space<vmem>>, vector<1x256x128xbf16>
    %6 = vector.shape_cast %5 : vector<1x256x128xbf16> to vector<256x128xbf16>
    %cst_6 = arith.constant dense<0.000000e+00> : vector<64x128xf32>
    %7 = tpu.matmul %4, %6, %cst_6 {dimension_numbers = #tpu.dot_dimension_numbers<[1], [0], [0], [1], [0, 0, 1, 1], [], []>} : vector<64x256xbf16>, vector<256x128xbf16>, vector<64x128xf32> -> vector<64x128xf32>
    %c0_7 = arith.constant 0 : index
    %c0_8 = arith.constant 0 : index
    %c0_9 = arith.constant 0 : index
    %8 = vector.load %arg4[%c0_7, %c0_8, %c0_9] : memref<3x1x128xf32, #tpu.memory_space<vmem>>, vector<1x1x128xf32>
    %9 = vector.shape_cast %8 : vector<1x1x128xf32> to vector<1x128xf32>
    %10 = vector.broadcast %9 : vector<1x128xf32> to vector<64x128xf32>
    %11 = arith.addf %7, %10 : vector<64x128xf32>
    %cst_10 = arith.constant 0.000000e+00 : f32
    %12 = vector.broadcast %cst_10 : f32 to vector<64x128xf32>
    %13 = arith.maximumf %11, %12 : vector<64x128xf32>
    %14 = arith.truncf %13 : vector<64x128xf32> to vector<64x128xbf16>
    %cst_11 = arith.constant dense<0.000000e+00> : vector<64x128xf32>
    %15 = tpu.matmul %0, %14, %cst_11 {dimension_numbers = #tpu.dot_dimension_numbers<[1], [0], [0], [1], [0, 0, 1, 1], [], []>} : vector<64x64xbf16>, vector<64x128xbf16>, vector<64x128xf32> -> vector<64x128xf32>
    %16 = arith.truncf %15 : vector<64x128xf32> to vector<64x128xbf16>
    %17 = tpu.concatenate %16, %14 in 1 : vector<64x128xbf16>, vector<64x128xbf16> -> vector<64x256xbf16>
    %c1 = arith.constant 1 : index
    %c0_12 = arith.constant 0 : index
    %c0_13 = arith.constant 0 : index
    %18 = vector.load %arg3[%c1, %c0_12, %c0_13] : memref<3x256x128xbf16, #tpu.memory_space<vmem>>, vector<1x256x128xbf16>
    %19 = vector.shape_cast %18 : vector<1x256x128xbf16> to vector<256x128xbf16>
    %cst_14 = arith.constant dense<0.000000e+00> : vector<64x128xf32>
    %20 = tpu.matmul %17, %19, %cst_14 {dimension_numbers = #tpu.dot_dimension_numbers<[1], [0], [0], [1], [0, 0, 1, 1], [], []>} : vector<64x256xbf16>, vector<256x128xbf16>, vector<64x128xf32> -> vector<64x128xf32>
    %c1_15 = arith.constant 1 : index
    %c0_16 = arith.constant 0 : index
    %c0_17 = arith.constant 0 : index
    %21 = vector.load %arg4[%c1_15, %c0_16, %c0_17] : memref<3x1x128xf32, #tpu.memory_space<vmem>>, vector<1x1x128xf32>
    %22 = vector.shape_cast %21 : vector<1x1x128xf32> to vector<1x128xf32>
    %23 = vector.broadcast %22 : vector<1x128xf32> to vector<64x128xf32>
    %24 = arith.addf %20, %23 : vector<64x128xf32>
    %cst_18 = arith.constant 0.000000e+00 : f32
    %25 = vector.broadcast %cst_18 : f32 to vector<64x128xf32>
    %26 = arith.maximumf %24, %25 : vector<64x128xf32>
    %27 = arith.truncf %26 : vector<64x128xf32> to vector<64x128xbf16>
    %cst_19 = arith.constant dense<0.000000e+00> : vector<64x128xf32>
    %28 = tpu.matmul %0, %27, %cst_19 {dimension_numbers = #tpu.dot_dimension_numbers<[1], [0], [0], [1], [0, 0, 1, 1], [], []>} : vector<64x64xbf16>, vector<64x128xbf16>, vector<64x128xf32> -> vector<64x128xf32>
    %29 = arith.truncf %28 : vector<64x128xf32> to vector<64x128xbf16>
    %30 = tpu.concatenate %29, %27 in 1 : vector<64x128xbf16>, vector<64x128xbf16> -> vector<64x256xbf16>
    %c2 = arith.constant 2 : index
    %c0_20 = arith.constant 0 : index
    %c0_21 = arith.constant 0 : index
    %31 = vector.load %arg3[%c2, %c0_20, %c0_21] : memref<3x256x128xbf16, #tpu.memory_space<vmem>>, vector<1x256x128xbf16>
    %32 = vector.shape_cast %31 : vector<1x256x128xbf16> to vector<256x128xbf16>
    %cst_22 = arith.constant dense<0.000000e+00> : vector<64x128xf32>
    %33 = tpu.matmul %30, %32, %cst_22 {dimension_numbers = #tpu.dot_dimension_numbers<[1], [0], [0], [1], [0, 0, 1, 1], [], []>} : vector<64x256xbf16>, vector<256x128xbf16>, vector<64x128xf32> -> vector<64x128xf32>
    %c2_23 = arith.constant 2 : index
    %c0_24 = arith.constant 0 : index
    %c0_25 = arith.constant 0 : index
    %34 = vector.load %arg4[%c2_23, %c0_24, %c0_25] : memref<3x1x128xf32, #tpu.memory_space<vmem>>, vector<1x1x128xf32>
    %35 = vector.shape_cast %34 : vector<1x1x128xf32> to vector<1x128xf32>
    %36 = vector.broadcast %35 : vector<1x128xf32> to vector<64x128xf32>
    %37 = arith.addf %33, %36 : vector<64x128xf32>
    %c0_26 = arith.constant 0 : index
    %c0_27 = arith.constant 0 : index
    %38 = vector.load %arg5[%c0_26, %c0_27] : memref<64x128xf32, #tpu.memory_space<vmem>>, vector<64x128xf32>
    tpu.vector_store %arg5[%c0_26, %c0_27], %37 {strides = array<i32>} : memref<64x128xf32, #tpu.memory_space<vmem>>, vector<64x128xf32>,
    return
  }
  func.func @transform_0(%arg0: i32) -> (i32, i32) {
    %c0_i32 = arith.constant 0 : i32
    %c0_i32_0 = arith.constant 0 : i32
    %c0_i32_1 = arith.constant 0 : i32
    return %c0_i32, %c0_i32_0 : i32, i32
  }
  func.func @transform_1(%arg0: i32) -> (i32, i32) {
    %c0_i32 = arith.constant 0 : i32
    %c0_i32_0 = arith.constant 0 : i32
    %c0_i32_1 = arith.constant 0 : i32
    return %c0_i32, %c0_i32_0 : i32, i32
  }
  func.func @transform_2(%arg0: i32) -> (i32, i32, i32) {
    %c0_i32 = arith.constant 0 : i32
    %c0_i32_0 = arith.constant 0 : i32
    %c0_i32_1 = arith.constant 0 : i32
    %c0_i32_2 = arith.constant 0 : i32
    return %c0_i32, %c0_i32_0, %c0_i32_1 : i32, i32, i32
  }
  func.func @transform_3(%arg0: i32) -> (i32, i32, i32) {
    %c0_i32 = arith.constant 0 : i32
    %c0_i32_0 = arith.constant 0 : i32
    %c0_i32_1 = arith.constant 0 : i32
    %c0_i32_2 = arith.constant 0 : i32
    return %c0_i32, %c0_i32_0, %c0_i32_1 : i32, i32, i32
  }
  func.func @transform_4(%arg0: i32) -> (i32, i32) {
    %c0_i32 = arith.constant 0 : i32
    %c0_i32_0 = arith.constant 0 : i32
    %c0_i32_1 = arith.constant 0 : i32
    return %c0_i32, %c0_i32_0 : i32, i32
  }
}

</mosaic_0001>

<llo_original>
// kernel: tpu_custom_call.1
$region0: #{tpu_custom_call.1}
  #allocation0 [shape = 'u32[]', space=smem, size = 0x4, offset = 0x4, fixed_abs, tag = 'smem constant byte address 0x4 - core index']
  #allocation1 [shape = 'u32[144,128]{1,0:T(1,128)}', space=vmem, size = 0x12000, scoped, tag = 'internal scratch']
  %s0 = inlined_call_operand.hbm [shape: bf16[64,64], index: 0, kind: input, shape index: {}]
  %s1 = inlined_call_operand.hbm [shape: bf16[64,128], index: 1, kind: input, shape index: {}]
  %s2 = inlined_call_operand.hbm [shape: bf16[3,256,128], index: 2, kind: input, shape index: {}]
  %s3 = inlined_call_operand.vmem [shape: f32[3,1,128], index: 3, kind: input, shape index: {}]
  %s4 = inlined_call_operand.hbm [shape: f32[64,128], index: 4, kind: output, shape index: {}]
  %s5 = sld [smem:[#allocation0]]
  $region38: #{tpu_custom_call.1} parent=0
    _
  %s7 = ssub.s32 1, %s5
  %s8 = scalar_select 0, %s7, %s5
  $region1: #{tpu_custom_call.1} parent=0
    #allocation2 [shape = 'u8[16384]{0}', space=vmem, size = 0x4000, scoped, tag = 'input window, operand 0, single buffered']
    #allocation3 [shape = 's32[1]{0}', space=sflag, size = 0x4, scoped, tag = 'scoped memory for tpu_custom_call.1']
    #allocation4 [shape = 's32[1]{0}', space=sflag, size = 0x4, scoped, tag = 'scoped memory for tpu_custom_call.1']
    #allocation5 [shape = 'u8[16384]{0}', space=vmem, size = 0x4000, scoped, tag = 'input window, operand 1, single buffered']
    #allocation6 [shape = 's32[1]{0}', space=sflag, size = 0x4, scoped, tag = 'scoped memory for tpu_custom_call.1']
    #allocation7 [shape = 'u8[196608]{0}', space=vmem, size = 0x30000, scoped, tag = 'input window, operand 2, single buffered']
    #allocation8 [shape = 'u8[32768]{0}', space=vmem, size = 0x8000, scoped, tag = 'output window, operand 0, single buffered']
    %9 = vsyncpa [#allocation3], 0
    %10 = vsyncpa [#allocation6], 0
    %11 = vsyncpa [#allocation4], 0
    // Predicated region
    $region2: #{tpu_custom_call.1} parent=1 // pred_check
      _
    $region3: #{tpu_custom_call.1} parent=1 // pred_check_branch
      %13 = sbr.rel (0) target = $region5
    $region4: #{tpu_custom_call.1} parent=1 // pred_region
      %s15 = ssub.s32 512, 512
      %16 = vsyncadd [#allocation3], %s15
      %s17 = sshll.u32 [#allocation2], 4
      %s18 = int_to_ptr.vmem [resolvable:$true] %s17
      %23 = dma.hbm_to_vmem [thread:$0]  %s0, 512, %s18, [#allocation3], 64, 64, 4
    $region5: #{tpu_custom_call.1} parent=1 // pred_fallthru
      _
    // Predicated region
    $region6: #{tpu_custom_call.1} parent=1 // pred_check
      _
    $region7: #{tpu_custom_call.1} parent=1 // pred_check_branch
      %25 = sbr.rel (0) target = $region9
    $region8: #{tpu_custom_call.1} parent=1 // pred_region
      %s27 = ssub.s32 512, 512
      %28 = vsyncadd [#allocation6], %s27
      %s29 = sshll.u32 [#allocation5], 4
      %s30 = int_to_ptr.vmem [resolvable:$true] %s29
      %35 = dma.hbm_to_vmem [thread:$0]  %s1, 512, %s30, [#allocation6], 64, 64, 4
    $region9: #{tpu_custom_call.1} parent=1 // pred_fallthru
      _
    // Predicated region
    $region10: #{tpu_custom_call.1} parent=1 // pred_check
      _
    $region11: #{tpu_custom_call.1} parent=1 // pred_check_branch
      %37 = sbr.rel (0) target = $region13
    $region12: #{tpu_custom_call.1} parent=1 // pred_region
      %s39 = ssub.s32 6144, 6144
      %40 = vsyncadd [#allocation6], %s39
      %s41 = sshll.u32 [#allocation7], 4
      %s42 = int_to_ptr.vmem [resolvable:$true] %s41
      %47 = dma.hbm_to_vmem [thread:$0]  %s2, 6144, %s42, [#allocation6], 64, 64, 4
    $region13: #{tpu_custom_call.1} parent=1 // pred_fallthru
      _
    // Predicated region
    $region14: #{tpu_custom_call.1} parent=1 // pred_check
      _
    $region15: #{tpu_custom_call.1} parent=1 // pred_check_branch
      %49 = sbr.rel (0) target = $region17
    $region16: #{tpu_custom_call.1} parent=1 // pred_region
      _
    $region17: #{tpu_custom_call.1} parent=1 // pred_fallthru
      _
    // Predicated region
    $region18: #{tpu_custom_call.1} parent=1 // pred_check
      _
    $region19: #{tpu_custom_call.1} parent=1 // pred_check_branch
      %51 = sbr.rel (0) target = $region21
    $region20: #{tpu_custom_call.1} parent=1 // pred_region
      %52 = dma.done [#allocation3], 512
    $region21: #{tpu_custom_call.1} parent=1 // pred_fallthru
      _
    // Predicated region
    $region22: #{tpu_custom_call.1} parent=1 // pred_check
      _
    $region23: #{tpu_custom_call.1} parent=1 // pred_check_branch
      %54 = sbr.rel (0) target = $region25
    $region24: #{tpu_custom_call.1} parent=1 // pred_region
      %55 = dma.done [#allocation6], 512
    $region25: #{tpu_custom_call.1} parent=1 // pred_fallthru
      _
    // Predicated region
    $region26: #{tpu_custom_call.1} parent=1 // pred_check
      _
    $region27: #{tpu_custom_call.1} parent=1 // pred_check_branch
      %57 = sbr.rel (0) target = $region29
    $region28: #{tpu_custom_call.1} parent=1 // pred_region
      %58 = dma.done [#allocation6], 6144
    $region29: #{tpu_custom_call.1} parent=1 // pred_fallthru
      _
    %v60 = vld [vmem:[#allocation2] sm:$0xf]
    %v61 = vld [vmem:[#allocation2 + $0x4] sm:$0xf]
    %v62 = vld [vmem:[#allocation2 + $0x8] sm:$0xf]
    %v63 = vld [vmem:[#allocation2 + $0xc] sm:$0xf]
    %v64 = vld [vmem:[#allocation2 + $0x10] sm:$0xf]
    %v65 = vld [vmem:[#allocation2 + $0x14] sm:$0xf]
    %v66 = vld [vmem:[#allocation2 + $0x18] sm:$0xf]
    %v67 = vld [vmem:[#allocation2 + $0x1c] sm:$0xf]
    %v68 = vld [vmem:[#allocation5] sm:$0xf]
    %v69 = vld [vmem:[#allocation5 + $0x4] sm:$0xf]
    %v70 = vld [vmem:[#allocation5 + $0x8] sm:$0xf]
    %v71 = vld [vmem:[#allocation5 + $0xc] sm:$0xf]
    %v72 = vld [vmem:[#allocation5 + $0x10] sm:$0xf]
    %v73 = vld [vmem:[#allocation5 + $0x14] sm:$0xf]
    %v74 = vld [vmem:[#allocation5 + $0x18] sm:$0xf]
    %v75 = vld [vmem:[#allocation5 + $0x1c] sm:$0xf]
    %v84 = vunpack.c.l.b16 %v60
    %v85 = vunpack.c.l.b16 %v61
    %v86 = vunpack.c.l.b16 %v62
    %v87 = vunpack.c.l.b16 %v63
    %v88 = vunpack.c.l.b16 %v64
    %v89 = vunpack.c.l.b16 %v65
    %v90 = vunpack.c.l.b16 %v66
    %v91 = vunpack.c.l.b16 %v67
    %v92 = vpack.c.b16 %v85, %v84
    %v93 = vpack.c.b16 %v87, %v86
    %v94 = vpack.c.b16 %v89, %v88
    %v95 = vpack.c.b16 %v91, %v90
    %v104 = vunpack.c.l.b16 %v68
    %v105 = vunpack.c.l.b16 %v69
    %v106 = vunpack.c.l.b16 %v70
    %v107 = vunpack.c.l.b16 %v71
    %v108 = vunpack.c.l.b16 %v72
    %v109 = vunpack.c.l.b16 %v73
    %v110 = vunpack.c.l.b16 %v74
    %v111 = vunpack.c.l.b16 %v75
    %v112 = vpack.c.b16 %v105, %v104
    %v113 = vpack.c.b16 %v107, %v106
    %v114 = vpack.c.b16 %v109, %v108
    %v115 = vpack.c.b16 %v111, %v110
    %vm120 = vcmask 523264
    %v122 = vsel %vm120, %v92, 0
    %v125 = vsel %vm120, %v93, 0
    %v128 = vsel %vm120, %v94, 0
    %v131 = vsel %vm120, %v95, 0
    %133 = vmatprep.subr.bf16.mxu0 0
    %134 = vmatpush1.bf16.msra.mxu0 0
    %135 = vmatprep.subr.bf16.mxu0 0
    %136 = vmatpush1.bf16.msra.mxu0 0
    %137 = vmatprep.subr.bf16.mxu0 0
    %138 = vmatpush1.bf16.msra.mxu0 0
    %139 = vmatprep.subr.bf16.mxu0 0
    %140 = vmatpush1.bf16.msra.mxu0 0
    %141 = vmatprep.subr.bf16.mxu0 0
    %142 = vmatpush1.bf16.msra.mxu0 %v115
    %143 = vmatprep.subr.bf16.mxu0 0
    %144 = vmatpush1.bf16.msra.mxu0 %v114
    %145 = vmatprep.subr.bf16.mxu0 0
    %146 = vmatpush1.bf16.msra.mxu0 %v113
    %147 = vmatprep.subr.bf16.mxu0 0
    %148 = vmatpush1.bf16.msra.mxu0 %v112
    %149 = vmatprep.subr.bf16.mxu0 0
    %150 = vmatpush2.bf16.msra.mxu0 0
    %151 = vmatprep.subr.bf16.mxu0 0
    %152 = vmatpush2.bf16.msra.mxu0 0
    %153 = vmatprep.subr.bf16.mxu0 0
    %154 = vmatpush2.bf16.msra.mxu0 0
    %155 = vmatprep.subr.bf16.mxu0 0
    %156 = vmatpush2.bf16.msra.mxu0 0
    %157 = vmatprep.subr.bf16.mxu0 0
    %158 = vmatpush2.bf16.msra.mxu0 0
    %159 = vmatprep.subr.bf16.mxu0 0
    %160 = vmatpush2.bf16.msra.mxu0 0
    %161 = vmatprep.subr.bf16.mxu0 0
    %162 = vmatpush2.bf16.msra.mxu0 0
    %163 = vmatprep.subr.bf16.mxu0 0
    %164 = vmatpush2.bf16.msra.mxu0 0
    %165 = vmatprep.mubr.bf16.mxu0 0
    %166 = vmatmul.mubr.bf16.gmra.mxu0 %v122
    %v167 = vpop.f32.mrf.mxu0
    %v168 = vadd.f32 0.0, %v167
    %v169 = vpop.f32.mrf.mxu0
    %v170 = vpop.f32.mrf.mxu0
    %v171 = vadd.f32 0.0, %v170
    %v172 = vpop.f32.mrf.mxu0
    %173 = vmatprep.mubr.bf16.mxu0 0
    %174 = vmatmul.mubr.bf16.gmra.mxu0 %v125
    %v175 = vpop.f32.mrf.mxu0
    %v176 = vadd.f32 0.0, %v175
    %v177 = vpop.f32.mrf.mxu0
    %v178 = vpop.f32.mrf.mxu0
    %v179 = vadd.f32 0.0, %v178
    %v180 = vpop.f32.mrf.mxu0
    %181 = vmatprep.mubr.bf16.mxu0 0
    %182 = vmatmul.mubr.bf16.gmra.mxu0 %v128
    %v183 = vpop.f32.mrf.mxu0
    %v184 = vadd.f32 0.0, %v183
    %v185 = vpop.f32.mrf.mxu0
    %v186 = vpop.f32.mrf.mxu0
    %v187 = vadd.f32 0.0, %v186
    %v188 = vpop.f32.mrf.mxu0
    %189 = vmatprep.mubr.bf16.mxu0 0
    %190 = vmatmul.mubr.bf16.gmra.mxu0 %v131
    %v191 = vpop.f32.mrf.mxu0
    %v192 = vadd.f32 0.0, %v191
    %v193 = vpop.f32.mrf.mxu0
    %v194 = vpop.f32.mrf.mxu0
    %v195 = vadd.f32 0.0, %v194
    %v196 = vpop.f32.mrf.mxu0
    %197 = vdwg.mxu0
    %v198 = vpack.c.bf16 %v171, %v168
    %v199 = vpack.c.bf16 %v179, %v176
    %v200 = vpack.c.bf16 %v187, %v184
    %v201 = vpack.c.bf16 %v195, %v192
    %v202 = vld [vmem:[#allocation7] sm:$0xf]
    %v203 = vld [vmem:[#allocation7 + $0x4] sm:$0xf]
    %v204 = vld [vmem:[#allocation7 + $0x8] sm:$0xf]
    %v205 = vld [vmem:[#allocation7 + $0xc] sm:$0xf]
    %v206 = vld [vmem:[#allocation7 + $0x10] sm:$0xf]
    %v207 = vld [vmem:[#allocation7 + $0x14] sm:$0xf]
    %v208 = vld [vmem:[#allocation7 + $0x18] sm:$0xf]
    %v209 = vld [vmem:[#allocation7 + $0x1c] sm:$0xf]
    %v210 = vld [vmem:[#allocation7 + $0x20] sm:$0xf]
    %v211 = vld [vmem:[#allocation7 + $0x24] sm:$0xf]
    %v212 = vld [vmem:[#allocation7 + $0x28] sm:$0xf]
    %v213 = vld [vmem:[#allocation7 + $0x2c] sm:$0xf]
    %v214 = vld [vmem:[#allocation7 + $0x30] sm:$0xf]
    %v215 = vld [vmem:[#allocation7 + $0x34] sm:$0xf]
    %v216 = vld [vmem:[#allocation7 + $0x38] sm:$0xf]
    %v217 = vld [vmem:[#allocation7 + $0x3c] sm:$0xf]
    %v218 = vld [vmem:[#allocation7 + $0x40] sm:$0xf]
    %v219 = vld [vmem:[#allocation7 + $0x44] sm:$0xf]
    %v220 = vld [vmem:[#allocation7 + $0x48] sm:$0xf]
    %v221 = vld [vmem:[#allocation7 + $0x4c] sm:$0xf]
    %v222 = vld [vmem:[#allocation7 + $0x50] sm:$0xf]
    %v223 = vld [vmem:[#allocation7 + $0x54] sm:$0xf]
    %v224 = vld [vmem:[#allocation7 + $0x58] sm:$0xf]
    %v225 = vld [vmem:[#allocation7 + $0x5c] sm:$0xf]
    %v226 = vld [vmem:[#allocation7 + $0x60] sm:$0xf]
    %v227 = vld [vmem:[#allocation7 + $0x64] sm:$0xf]
    %v228 = vld [vmem:[#allocation7 + $0x68] sm:$0xf]
    %v229 = vld [vmem:[#allocation7 + $0x6c] sm:$0xf]
    %v230 = vld [vmem:[#allocation7 + $0x70] sm:$0xf]
    %v231 = vld [vmem:[#allocation7 + $0x74] sm:$0xf]
    %v232 = vld [vmem:[#allocation7 + $0x78] sm:$0xf]
    %v233 = vld [vmem:[#allocation7 + $0x7c] sm:$0xf]
    %v234 = vld [vmem:[%s3] sm:$0x1]
    %v236 = vlaneseq
    %v237 = vshrl.u32 %v236, 7
    %v238 = vsub.s32 0, %v237
    %v239 = vrot.slane %v234, %v238
    %v273 = vunpack.c.l.b16 %v202
    %v274 = vunpack.c.l.b16 %v203
    %v275 = vunpack.c.l.b16 %v204
    %v276 = vunpack.c.l.b16 %v205
    %v277 = vunpack.c.l.b16 %v206
    %v278 = vunpack.c.l.b16 %v207
    %v279 = vunpack.c.l.b16 %v208
    %v280 = vunpack.c.l.b16 %v209
    %v281 = vunpack.c.l.b16 %v210
    %v282 = vunpack.c.l.b16 %v211
    %v283 = vunpack.c.l.b16 %v212
    %v284 = vunpack.c.l.b16 %v213
    %v285 = vunpack.c.l.b16 %v214
    %v286 = vunpack.c.l.b16 %v215
    %v287 = vunpack.c.l.b16 %v216
    %v288 = vunpack.c.l.b16 %v217
    %v289 = vunpack.c.l.b16 %v218
    %v290 = vunpack.c.l.b16 %v219
    %v291 = vunpack.c.l.b16 %v220
    %v292 = vunpack.c.l.b16 %v221
    %v293 = vunpack.c.l.b16 %v222
    %v294 = vunpack.c.l.b16 %v223
    %v295 = vunpack.c.l.b16 %v224
    %v296 = vunpack.c.l.b16 %v225
    %v297 = vunpack.c.l.b16 %v226
    %v298 = vunpack.c.l.b16 %v227
    %v299 = vunpack.c.l.b16 %v228
    %v300 = vunpack.c.l.b16 %v229
    %v301 = vunpack.c.l.b16 %v230
    %v302 = vunpack.c.l.b16 %v231
    %v303 = vunpack.c.l.b16 %v232
    %v304 = vunpack.c.l.b16 %v233
    %v305 = vpack.c.b16 %v274, %v273
    %v306 = vpack.c.b16 %v276, %v275
    %v307 = vpack.c.b16 %v278, %v277
    %v308 = vpack.c.b16 %v280, %v279
    %v309 = vpack.c.b16 %v282, %v281
    %v310 = vpack.c.b16 %v284, %v283
    %v311 = vpack.c.b16 %v286, %v285
    %v312 = vpack.c.b16 %v288, %v287
    %v313 = vpack.c.b16 %v290, %v289
    %v314 = vpack.c.b16 %v292, %v291
    %v315 = vpack.c.b16 %v294, %v293
    %v316 = vpack.c.b16 %v296, %v295
    %v317 = vpack.c.b16 %v298, %v297
    %v318 = vpack.c.b16 %v300, %v299
    %v319 = vpack.c.b16 %v302, %v301
    %v320 = vpack.c.b16 %v304, %v303
    %337 = vmatprep.subr.bf16.mxu0 0
    %338 = vmatpush1.bf16.msra.mxu0 %v312
    %339 = vmatprep.subr.bf16.mxu0 0
    %340 = vmatpush1.bf16.msra.mxu0 %v311
    %341 = vmatprep.subr.bf16.mxu0 0
    %342 = vmatpush1.bf16.msra.mxu0 %v310
    %343 = vmatprep.subr.bf16.mxu0 0
    %344 = vmatpush1.bf16.msra.mxu0 %v309
    %345 = vmatprep.subr.bf16.mxu0 0
    %346 = vmatpush1.bf16.msra.mxu0 %v308
    %347 = vmatprep.subr.bf16.mxu0 0
    %348 = vmatpush1.bf16.msra.mxu0 %v307
    %349 = vmatprep.subr.bf16.mxu0 0
    %350 = vmatpush1.bf16.msra.mxu0 %v306
    %351 = vmatprep.subr.bf16.mxu0 0
    %352 = vmatpush1.bf16.msra.mxu0 %v305
    %353 = vmatprep.subr.bf16.mxu0 0
    %354 = vmatpush2.bf16.msra.mxu0 %v320
    %355 = vmatprep.subr.bf16.mxu0 0
    %356 = vmatpush2.bf16.msra.mxu0 %v319
    %357 = vmatprep.subr.bf16.mxu0 0
    %358 = vmatpush2.bf16.msra.mxu0 %v318
    %359 = vmatprep.subr.bf16.mxu0 0
    %360 = vmatpush2.bf16.msra.mxu0 %v317
    %361 = vmatprep.subr.bf16.mxu0 0
    %362 = vmatpush2.bf16.msra.mxu0 %v316
    %363 = vmatprep.subr.bf16.mxu0 0
    %364 = vmatpush2.bf16.msra.mxu0 %v315
    %365 = vmatprep.subr.bf16.mxu0 0
    %366 = vmatpush2.bf16.msra.mxu0 %v314
    %367 = vmatprep.subr.bf16.mxu0 0
    %368 = vmatpush2.bf16.msra.mxu0 %v313
    %369 = vmatprep.mubr.bf16.mxu0 %v112
    %370 = vmatmul.mubr.bf16.gmra.mxu0 %v198
    %v371 = vpop.f32.mrf.mxu0
    %v372 = vadd.f32 %v239, %v371
    %v373 = vpop.f32.mrf.mxu0
    %v374 = vpop.f32.mrf.mxu0
    %v375 = vadd.f32 %v239, %v374
    %v376 = vpop.f32.mrf.mxu0
    %377 = vmatprep.mubr.bf16.mxu0 %v113
    %378 = vmatmul.mubr.bf16.gmra.mxu0 %v199
    %v379 = vpop.f32.mrf.mxu0
    %v380 = vadd.f32 %v239, %v379
    %v381 = vpop.f32.mrf.mxu0
    %v382 = vpop.f32.mrf.mxu0
    %v383 = vadd.f32 %v239, %v382
    %v384 = vpop.f32.mrf.mxu0
    %385 = vmatprep.mubr.bf16.mxu0 %v114
    %386 = vmatmul.mubr.bf16.gmra.mxu0 %v200
    %v387 = vpop.f32.mrf.mxu0
    %v388 = vadd.f32 %v239, %v387
    %v389 = vpop.f32.mrf.mxu0
    %v390 = vpop.f32.mrf.mxu0
    %v391 = vadd.f32 %v239, %v390
    %v392 = vpop.f32.mrf.mxu0
    %393 = vmatprep.mubr.bf16.mxu0 %v115
    %394 = vmatmul.mubr.bf16.gmra.mxu0 %v201
    %v395 = vpop.f32.mrf.mxu0
    %v396 = vadd.f32 %v239, %v395
    %v397 = vpop.f32.mrf.mxu0
    %v398 = vpop.f32.mrf.mxu0
    %v399 = vadd.f32 %v239, %v398
    %v400 = vpop.f32.mrf.mxu0
    %401 = vdwg.mxu0
    %v402 = vmax.f32 %v372, 0.0
    %v403 = vmax.f32 %v375, 0.0
    %v404 = vmax.f32 %v380, 0.0
    %v405 = vmax.f32 %v383, 0.0
    %v406 = vmax.f32 %v388, 0.0
    %v407 = vmax.f32 %v391, 0.0
    %v408 = vmax.f32 %v396, 0.0
    %v409 = vmax.f32 %v399, 0.0
    %v410 = vpack.c.bf16 %v403, %v402
    %v411 = vpack.c.bf16 %v405, %v404
    %v412 = vpack.c.bf16 %v407, %v406
    %v413 = vpack.c.bf16 %v409, %v408
    %414 = vmatprep.subr.bf16.mxu0 0
    %415 = vmatpush1.bf16.msra.mxu0 0
    %416 = vmatprep.subr.bf16.mxu0 0
    %417 = vmatpush1.bf16.msra.mxu0 0
    %418 = vmatprep.subr.bf16.mxu0 0
    %419 = vmatpush1.bf16.msra.mxu0 0
    %420 = vmatprep.subr.bf16.mxu0 0
    %421 = vmatpush1.bf16.msra.mxu0 0
    %422 = vmatprep.subr.bf16.mxu0 0
    %423 = vmatpush1.bf16.msra.mxu0 %v413
    %424 = vmatprep.subr.bf16.mxu0 0
    %425 = vmatpush1.bf16.msra.mxu0 %v412
    %426 = vmatprep.subr.bf16.mxu0 0
    %427 = vmatpush1.bf16.msra.mxu0 %v411
    %428 = vmatprep.subr.bf16.mxu0 0
    %429 = vmatpush1.bf16.msra.mxu0 %v410
    %430 = vmatprep.subr.bf16.mxu0 0
    %431 = vmatpush2.bf16.msra.mxu0 0
    %432 = vmatprep.subr.bf16.mxu0 0
    %433 = vmatpush2.bf16.msra.mxu0 0
    %434 = vmatprep.subr.bf16.mxu0 0
    %435 = vmatpush2.bf16.msra.mxu0 0
    %436 = vmatprep.subr.bf16.mxu0 0
    %437 = vmatpush2.bf16.msra.mxu0 0
    %438 = vmatprep.subr.bf16.mxu0 0
    %439 = vmatpush2.bf16.msra.mxu0 0
    %440 = vmatprep.subr.bf16.mxu0 0
    %441 = vmatpush2.bf16.msra.mxu0 0
    %442 = vmatprep.subr.bf16.mxu0 0
    %443 = vmatpush2.bf16.msra.mxu0 0
    %444 = vmatprep.subr.bf16.mxu0 0
    %445 = vmatpush2.bf16.msra.mxu0 0
    %446 = vmatprep.mubr.bf16.mxu0 0
    %447 = vmatmul.mubr.bf16.gmra.mxu0 %v122
    %v448 = vpop.f32.mrf.mxu0
    %v449 = vadd.f32 0.0, %v448
    %v450 = vpop.f32.mrf.mxu0
    %v451 = vpop.f32.mrf.mxu0
    %v452 = vadd.f32 0.0, %v451
    %v453 = vpop.f32.mrf.mxu0
    %454 = vmatprep.mubr.bf16.mxu0 0
    %455 = vmatmul.mubr.bf16.gmra.mxu0 %v125
    %v456 = vpop.f32.mrf.mxu0
    %v457 = vadd.f32 0.0, %v456
    %v458 = vpop.f32.mrf.mxu0
    %v459 = vpop.f32.mrf.mxu0
    %v460 = vadd.f32 0.0, %v459
    %v461 = vpop.f32.mrf.mxu0
    %462 = vmatprep.mubr.bf16.mxu0 0
    %463 = vmatmul.mubr.bf16.gmra.mxu0 %v128
    %v464 = vpop.f32.mrf.mxu0
    %v465 = vadd.f32 0.0, %v464
    %v466 = vpop.f32.mrf.mxu0
    %v467 = vpop.f32.mrf.mxu0
    %v468 = vadd.f32 0.0, %v467
    %v469 = vpop.f32.mrf.mxu0
    %470 = vmatprep.mubr.bf16.mxu0 0
    %471 = vmatmul.mubr.bf16.gmra.mxu0 %v131
    %v472 = vpop.f32.mrf.mxu0
    %v473 = vadd.f32 0.0, %v472
    %v474 = vpop.f32.mrf.mxu0
    %v475 = vpop.f32.mrf.mxu0
    %v476 = vadd.f32 0.0, %v475
    %v477 = vpop.f32.mrf.mxu0
    %478 = vdwg.mxu0
    %v479 = vpack.c.bf16 %v452, %v449
    %v480 = vpack.c.bf16 %v460, %v457
    %v481 = vpack.c.bf16 %v468, %v465
    %v482 = vpack.c.bf16 %v476, %v473
    %s483 = scalar_lea.vmem [#allocation7], 128
    %v484 = vld [vmem:[%s483] sm:$0xf]
    %v485 = vld [vmem:[%s483 + $0x4] sm:$0xf]
    %v486 = vld [vmem:[%s483 + $0x8] sm:$0xf]
    %v487 = vld [vmem:[%s483 + $0xc] sm:$0xf]
    %v488 = vld [vmem:[%s483 + $0x10] sm:$0xf]
    %v489 = vld [vmem:[%s483 + $0x14] sm:$0xf]
    %v490 = vld [vmem:[%s483 + $0x18] sm:$0xf]
    %v491 = vld [vmem:[%s483 + $0x1c] sm:$0xf]
    %v492 = vld [vmem:[%s483 + $0x20] sm:$0xf]
    %v493 = vld [vmem:[%s483 + $0x24] sm:$0xf]
    %v494 = vld [vmem:[%s483 + $0x28] sm:$0xf]
    %v495 = vld [vmem:[%s483 + $0x2c] sm:$0xf]
    %v496 = vld [vmem:[%s483 + $0x30] sm:$0xf]
    %v497 = vld [vmem:[%s483 + $0x34] sm:$0xf]
    %v498 = vld [vmem:[%s483 + $0x38] sm:$0xf]
    %v499 = vld [vmem:[%s483 + $0x3c] sm:$0xf]
    %v500 = vld [vmem:[%s483 + $0x40] sm:$0xf]
    %v501 = vld [vmem:[%s483 + $0x44] sm:$0xf]
    %v502 = vld [vmem:[%s483 + $0x48] sm:$0xf]
    %v503 = vld [vmem:[%s483 + $0x4c] sm:$0xf]
    %v504 = vld [vmem:[%s483 + $0x50] sm:$0xf]
    %v505 = vld [vmem:[%s483 + $0x54] sm:$0xf]
    %v506 = vld [vmem:[%s483 + $0x58] sm:$0xf]
    %v507 = vld [vmem:[%s483 + $0x5c] sm:$0xf]
    %v508 = vld [vmem:[%s483 + $0x60] sm:$0xf]
    %v509 = vld [vmem:[%s483 + $0x64] sm:$0xf]
    %v510 = vld [vmem:[%s483 + $0x68] sm:$0xf]
    %v511 = vld [vmem:[%s483 + $0x6c] sm:$0xf]
    %v512 = vld [vmem:[%s483 + $0x70] sm:$0xf]
    %v513 = vld [vmem:[%s483 + $0x74] sm:$0xf]
    %v514 = vld [vmem:[%s483 + $0x78] sm:$0xf]
    %v515 = vld [vmem:[%s483 + $0x7c] sm:$0xf]
    %s516 = scalar_lea.vmem %s3, 1
    %v517 = vld [vmem:[%s516] sm:$0x1]
    %v519 = vlaneseq
    %v520 = vshrl.u32 %v519, 7
    %v521 = vsub.s32 0, %v520
    %v522 = vrot.slane %v517, %v521
    %v556 = vunpack.c.l.b16 %v484
    %v557 = vunpack.c.l.b16 %v485
    %v558 = vunpack.c.l.b16 %v486
    %v559 = vunpack.c.l.b16 %v487
    %v560 = vunpack.c.l.b16 %v488
    %v561 = vunpack.c.l.b16 %v489
    %v562 = vunpack.c.l.b16 %v490
    %v563 = vunpack.c.l.b16 %v491
    %v564 = vunpack.c.l.b16 %v492
    %v565 = vunpack.c.l.b16 %v493
    %v566 = vunpack.c.l.b16 %v494
    %v567 = vunpack.c.l.b16 %v495
    %v568 = vunpack.c.l.b16 %v496
    %v569 = vunpack.c.l.b16 %v497
    %v570 = vunpack.c.l.b16 %v498
    %v571 = vunpack.c.l.b16 %v499
    %v572 = vunpack.c.l.b16 %v500
    %v573 = vunpack.c.l.b16 %v501
    %v574 = vunpack.c.l.b16 %v502
    %v575 = vunpack.c.l.b16 %v503
    %v576 = vunpack.c.l.b16 %v504
    %v577 = vunpack.c.l.b16 %v505
    %v578 = vunpack.c.l.b16 %v506
    %v579 = vunpack.c.l.b16 %v507
    %v580 = vunpack.c.l.b16 %v508
    %v581 = vunpack.c.l.b16 %v509
    %v582 = vunpack.c.l.b16 %v510
    %v583 = vunpack.c.l.b16 %v511
    %v584 = vunpack.c.l.b16 %v512
    %v585 = vunpack.c.l.b16 %v513
    %v586 = vunpack.c.l.b16 %v514
    %v587 = vunpack.c.l.b16 %v515
    %v588 = vpack.c.b16 %v557, %v556
    %v589 = vpack.c.b16 %v559, %v558
    %v590 = vpack.c.b16 %v561, %v560
    %v591 = vpack.c.b16 %v563, %v562
    %v592 = vpack.c.b16 %v565, %v564
    %v593 = vpack.c.b16 %v567, %v566
    %v594 = vpack.c.b16 %v569, %v568
    %v595 = vpack.c.b16 %v571, %v570
    %v596 = vpack.c.b16 %v573, %v572
    %v597 = vpack.c.b16 %v575, %v574
    %v598 = vpack.c.b16 %v577, %v576
    %v599 = vpack.c.b16 %v579, %v578
    %v600 = vpack.c.b16 %v581, %v580
    %v601 = vpack.c.b16 %v583, %v582
    %v602 = vpack.c.b16 %v585, %v584
    %v603 = vpack.c.b16 %v587, %v586
    %620 = vmatprep.subr.bf16.mxu0 0
    %621 = vmatpush1.bf16.msra.mxu0 %v595
    %622 = vmatprep.subr.bf16.mxu0 0
    %623 = vmatpush1.bf16.msra.mxu0 %v594
    %624 = vmatprep.subr.bf16.mxu0 0
    %625 = vmatpush1.bf16.msra.mxu0 %v593
    %626 = vmatprep.subr.bf16.mxu0 0
    %627 = vmatpush1.bf16.msra.mxu0 %v592
    %628 = vmatprep.subr.bf16.mxu0 0
    %629 = vmatpush1.bf16.msra.mxu0 %v591
    %630 = vmatprep.subr.bf16.mxu0 0
    %631 = vmatpush1.bf16.msra.mxu0 %v590
    %632 = vmatprep.subr.bf16.mxu0 0
    %633 = vmatpush1.bf16.msra.mxu0 %v589
    %634 = vmatprep.subr.bf16.mxu0 0
    %635 = vmatpush1.bf16.msra.mxu0 %v588
    %636 = vmatprep.subr.bf16.mxu0 0
    %637 = vmatpush2.bf16.msra.mxu0 %v603
    %638 = vmatprep.subr.bf16.mxu0 0
    %639 = vmatpush2.bf16.msra.mxu0 %v602
    %640 = vmatprep.subr.bf16.mxu0 0
    %641 = vmatpush2.bf16.msra.mxu0 %v601
    %642 = vmatprep.subr.bf16.mxu0 0
    %643 = vmatpush2.bf16.msra.mxu0 %v600
    %644 = vmatprep.subr.bf16.mxu0 0
    %645 = vmatpush2.bf16.msra.mxu0 %v599
    %646 = vmatprep.subr.bf16.mxu0 0
    %647 = vmatpush2.bf16.msra.mxu0 %v598
    %648 = vmatprep.subr.bf16.mxu0 0
    %649 = vmatpush2.bf16.msra.mxu0 %v597
    %650 = vmatprep.subr.bf16.mxu0 0
    %651 = vmatpush2.bf16.msra.mxu0 %v596
    %652 = vmatprep.mubr.bf16.mxu0 %v410
    %653 = vmatmul.mubr.bf16.gmra.mxu0 %v479
    %v654 = vpop.f32.mrf.mxu0
    %v655 = vadd.f32 %v522, %v654
    %v656 = vpop.f32.mrf.mxu0
    %v657 = vpop.f32.mrf.mxu0
    %v658 = vadd.f32 %v522, %v657
    %v659 = vpop.f32.mrf.mxu0
    %660 = vmatprep.mubr.bf16.mxu0 %v411
    %661 = vmatmul.mubr.bf16.gmra.mxu0 %v480
    %v662 = vpop.f32.mrf.mxu0
    %v663 = vadd.f32 %v522, %v662
    %v664 = vpop.f32.mrf.mxu0
    %v665 = vpop.f32.mrf.mxu0
    %v666 = vadd.f32 %v522, %v665
    %v667 = vpop.f32.mrf.mxu0
    %668 = vmatprep.mubr.bf16.mxu0 %v412
    %669 = vmatmul.mubr.bf16.gmra.mxu0 %v481
    %v670 = vpop.f32.mrf.mxu0
    %v671 = vadd.f32 %v522, %v670
    %v672 = vpop.f32.mrf.mxu0
    %v673 = vpop.f32.mrf.mxu0
    %v674 = vadd.f32 %v522, %v673
    %v675 = vpop.f32.mrf.mxu0
    %676 = vmatprep.mubr.bf16.mxu0 %v413
    %677 = vmatmul.mubr.bf16.gmra.mxu0 %v482
    %v678 = vpop.f32.mrf.mxu0
    %v679 = vadd.f32 %v522, %v678
    %v680 = vpop.f32.mrf.mxu0
    %v681 = vpop.f32.mrf.mxu0
    %v682 = vadd.f32 %v522, %v681
    %v683 = vpop.f32.mrf.mxu0
    %684 = vdwg.mxu0
    %v685 = vmax.f32 %v655, 0.0
    %v686 = vmax.f32 %v658, 0.0
    %v687 = vmax.f32 %v663, 0.0
    %v688 = vmax.f32 %v666, 0.0
    %v689 = vmax.f32 %v671, 0.0
    %v690 = vmax.f32 %v674, 0.0
    %v691 = vmax.f32 %v679, 0.0
    %v692 = vmax.f32 %v682, 0.0
    %v693 = vpack.c.bf16 %v686, %v685
    %v694 = vpack.c.bf16 %v688, %v687
    %v695 = vpack.c.bf16 %v690, %v689
    %v696 = vpack.c.bf16 %v692, %v691
    %697 = vmatprep.subr.bf16.mxu0 0
    %698 = vmatpush1.bf16.msra.mxu0 0
    %699 = vmatprep.subr.bf16.mxu0 0
    %700 = vmatpush1.bf16.msra.mxu0 0
    %701 = vmatprep.subr.bf16.mxu0 0
    %702 = vmatpush1.bf16.msra.mxu0 0
    %703 = vmatprep.subr.bf16.mxu0 0
    %704 = vmatpush1.bf16.msra.mxu0 0
    %705 = vmatprep.subr.bf16.mxu0 0
    %706 = vmatpush1.bf16.msra.mxu0 %v696
    %707 = vmatprep.subr.bf16.mxu0 0
    %708 = vmatpush1.bf16.msra.mxu0 %v695
    %709 = vmatprep.subr.bf16.mxu0 0
    %710 = vmatpush1.bf16.msra.mxu0 %v694
    %711 = vmatprep.subr.bf16.mxu0 0
    %712 = vmatpush1.bf16.msra.mxu0 %v693
    %713 = vmatprep.subr.bf16.mxu0 0
    %714 = vmatpush2.bf16.msra.mxu0 0
    %715 = vmatprep.subr.bf16.mxu0 0
    %716 = vmatpush2.bf16.msra.mxu0 0
    %717 = vmatprep.subr.bf16.mxu0 0
    %718 = vmatpush2.bf16.msra.mxu0 0
    %719 = vmatprep.subr.bf16.mxu0 0
    %720 = vmatpush2.bf16.msra.mxu0 0
    %721 = vmatprep.subr.bf16.mxu0 0
    %722 = vmatpush2.bf16.msra.mxu0 0
    %723 = vmatprep.subr.bf16.mxu0 0
    %724 = vmatpush2.bf16.msra.mxu0 0
    %725 = vmatprep.subr.bf16.mxu0 0
    %726 = vmatpush2.bf16.msra.mxu0 0
    %727 = vmatprep.subr.bf16.mxu0 0
    %728 = vmatpush2.bf16.msra.mxu0 0
    %729 = vmatprep.mubr.bf16.mxu0 0
    %730 = vmatmul.mubr.bf16.gmra.mxu0 %v122
    %v731 = vpop.f32.mrf.mxu0
    %v732 = vadd.f32 0.0, %v731
    %v733 = vpop.f32.mrf.mxu0
    %v734 = vpop.f32.mrf.mxu0
    %v735 = vadd.f32 0.0, %v734
    %v736 = vpop.f32.mrf.mxu0
    %737 = vmatprep.mubr.bf16.mxu0 0
    %738 = vmatmul.mubr.bf16.gmra.mxu0 %v125
    %v739 = vpop.f32.mrf.mxu0
    %v740 = vadd.f32 0.0, %v739
    %v741 = vpop.f32.mrf.mxu0
    %v742 = vpop.f32.mrf.mxu0
    %v743 = vadd.f32 0.0, %v742
    %v744 = vpop.f32.mrf.mxu0
    %745 = vmatprep.mubr.bf16.mxu0 0
    %746 = vmatmul.mubr.bf16.gmra.mxu0 %v128
    %v747 = vpop.f32.mrf.mxu0
    %v748 = vadd.f32 0.0, %v747
    %v749 = vpop.f32.mrf.mxu0
    %v750 = vpop.f32.mrf.mxu0
    %v751 = vadd.f32 0.0, %v750
    %v752 = vpop.f32.mrf.mxu0
    %753 = vmatprep.mubr.bf16.mxu0 0
    %754 = vmatmul.mubr.bf16.gmra.mxu0 %v131
    %v755 = vpop.f32.mrf.mxu0
    %v756 = vadd.f32 0.0, %v755
    %v757 = vpop.f32.mrf.mxu0
    %v758 = vpop.f32.mrf.mxu0
    %v759 = vadd.f32 0.0, %v758
    %v760 = vpop.f32.mrf.mxu0
    %761 = vdwg.mxu0
    %v762 = vpack.c.bf16 %v735, %v732
    %v763 = vpack.c.bf16 %v743, %v740
    %v764 = vpack.c.bf16 %v751, %v748
    %v765 = vpack.c.bf16 %v759, %v756
    %s766 = scalar_lea.vmem [#allocation7], 256
    %v767 = vld [vmem:[%s766] sm:$0xf]
    %v768 = vld [vmem:[%s766 + $0x4] sm:$0xf]
    %v769 = vld [vmem:[%s766 + $0x8] sm:$0xf]
    %v770 = vld [vmem:[%s766 + $0xc] sm:$0xf]
    %v771 = vld [vmem:[%s766 + $0x10] sm:$0xf]
    %v772 = vld [vmem:[%s766 + $0x14] sm:$0xf]
    %v773 = vld [vmem:[%s766 + $0x18] sm:$0xf]
    %v774 = vld [vmem:[%s766 + $0x1c] sm:$0xf]
    %v775 = vld [vmem:[%s766 + $0x20] sm:$0xf]
    %v776 = vld [vmem:[%s766 + $0x24] sm:$0xf]
    %v777 = vld [vmem:[%s766 + $0x28] sm:$0xf]
    %v778 = vld [vmem:[%s766 + $0x2c] sm:$0xf]
    %v779 = vld [vmem:[%s766 + $0x30] sm:$0xf]
    %v780 = vld [vmem:[%s766 + $0x34] sm:$0xf]
    %v781 = vld [vmem:[%s766 + $0x38] sm:$0xf]
    %v782 = vld [vmem:[%s766 + $0x3c] sm:$0xf]
    %v783 = vld [vmem:[%s766 + $0x40] sm:$0xf]
    %v784 = vld [vmem:[%s766 + $0x44] sm:$0xf]
    %v785 = vld [vmem:[%s766 + $0x48] sm:$0xf]
    %v786 = vld [vmem:[%s766 + $0x4c] sm:$0xf]
    %v787 = vld [vmem:[%s766 + $0x50] sm:$0xf]
    %v788 = vld [vmem:[%s766 + $0x54] sm:$0xf]
    %v789 = vld [vmem:[%s766 + $0x58] sm:$0xf]
    %v790 = vld [vmem:[%s766 + $0x5c] sm:$0xf]
    %v791 = vld [vmem:[%s766 + $0x60] sm:$0xf]
    %v792 = vld [vmem:[%s766 + $0x64] sm:$0xf]
    %v793 = vld [vmem:[%s766 + $0x68] sm:$0xf]
    %v794 = vld [vmem:[%s766 + $0x6c] sm:$0xf]
    %v795 = vld [vmem:[%s766 + $0x70] sm:$0xf]
    %v796 = vld [vmem:[%s766 + $0x74] sm:$0xf]
    %v797 = vld [vmem:[%s766 + $0x78] sm:$0xf]
    %v798 = vld [vmem:[%s766 + $0x7c] sm:$0xf]
    %s799 = scalar_lea.vmem %s3, 2
    %v800 = vld [vmem:[%s799] sm:$0x1]
    %v802 = vlaneseq
    %v803 = vshrl.u32 %v802, 7
    %v804 = vsub.s32 0, %v803
    %v805 = vrot.slane %v800, %v804
    %v839 = vunpack.c.l.b16 %v767
    %v840 = vunpack.c.l.b16 %v768
    %v841 = vunpack.c.l.b16 %v769
    %v842 = vunpack.c.l.b16 %v770
    %v843 = vunpack.c.l.b16 %v771
    %v844 = vunpack.c.l.b16 %v772
    %v845 = vunpack.c.l.b16 %v773
    %v846 = vunpack.c.l.b16 %v774
    %v847 = vunpack.c.l.b16 %v775
    %v848 = vunpack.c.l.b16 %v776
    %v849 = vunpack.c.l.b16 %v777
    %v850 = vunpack.c.l.b16 %v778
    %v851 = vunpack.c.l.b16 %v779
    %v852 = vunpack.c.l.b16 %v780
    %v853 = vunpack.c.l.b16 %v781
    %v854 = vunpack.c.l.b16 %v782
    %v855 = vunpack.c.l.b16 %v783
    %v856 = vunpack.c.l.b16 %v784
    %v857 = vunpack.c.l.b16 %v785
    %v858 = vunpack.c.l.b16 %v786
    %v859 = vunpack.c.l.b16 %v787
    %v860 = vunpack.c.l.b16 %v788
    %v861 = vunpack.c.l.b16 %v789
    %v862 = vunpack.c.l.b16 %v790
    %v863 = vunpack.c.l.b16 %v791
    %v864 = vunpack.c.l.b16 %v792
    %v865 = vunpack.c.l.b16 %v793
    %v866 = vunpack.c.l.b16 %v794
    %v867 = vunpack.c.l.b16 %v795
    %v868 = vunpack.c.l.b16 %v796
    %v869 = vunpack.c.l.b16 %v797
    %v870 = vunpack.c.l.b16 %v798
    %v871 = vpack.c.b16 %v840, %v839
    %v872 = vpack.c.b16 %v842, %v841
    %v873 = vpack.c.b16 %v844, %v843
    %v874 = vpack.c.b16 %v846, %v845
    %v875 = vpack.c.b16 %v848, %v847
    %v876 = vpack.c.b16 %v850, %v849
    %v877 = vpack.c.b16 %v852, %v851
    %v878 = vpack.c.b16 %v854, %v853
    %v879 = vpack.c.b16 %v856, %v855
    %v880 = vpack.c.b16 %v858, %v857
    %v881 = vpack.c.b16 %v860, %v859
    %v882 = vpack.c.b16 %v862, %v861
    %v883 = vpack.c.b16 %v864, %v863
    %v884 = vpack.c.b16 %v866, %v865
    %v885 = vpack.c.b16 %v868, %v867
    %v886 = vpack.c.b16 %v870, %v869
    %903 = vmatprep.subr.bf16.mxu0 0
    %904 = vmatpush1.bf16.msra.mxu0 %v878
    %905 = vmatprep.subr.bf16.mxu0 0
    %906 = vmatpush1.bf16.msra.mxu0 %v877
    %907 = vmatprep.subr.bf16.mxu0 0
    %908 = vmatpush1.bf16.msra.mxu0 %v876
    %909 = vmatprep.subr.bf16.mxu0 0
    %910 = vmatpush1.bf16.msra.mxu0 %v875
    %911 = vmatprep.subr.bf16.mxu0 0
    %912 = vmatpush1.bf16.msra.mxu0 %v874
    %913 = vmatprep.subr.bf16.mxu0 0
    %914 = vmatpush1.bf16.msra.mxu0 %v873
    %915 = vmatprep.subr.bf16.mxu0 0
    %916 = vmatpush1.bf16.msra.mxu0 %v872
    %917 = vmatprep.subr.bf16.mxu0 0
    %918 = vmatpush1.bf16.msra.mxu0 %v871
    %919 = vmatprep.subr.bf16.mxu0 0
    %920 = vmatpush2.bf16.msra.mxu0 %v886
    %921 = vmatprep.subr.bf16.mxu0 0
    %922 = vmatpush2.bf16.msra.mxu0 %v885
    %923 = vmatprep.subr.bf16.mxu0 0
    %924 = vmatpush2.bf16.msra.mxu0 %v884
    %925 = vmatprep.subr.bf16.mxu0 0
    %926 = vmatpush2.bf16.msra.mxu0 %v883
    %927 = vmatprep.subr.bf16.mxu0 0
    %928 = vmatpush2.bf16.msra.mxu0 %v882
    %929 = vmatprep.subr.bf16.mxu0 0
    %930 = vmatpush2.bf16.msra.mxu0 %v881
    %931 = vmatprep.subr.bf16.mxu0 0
    %932 = vmatpush2.bf16.msra.mxu0 %v880
    %933 = vmatprep.subr.bf16.mxu0 0
    %934 = vmatpush2.bf16.msra.mxu0 %v879
    %935 = vmatprep.mubr.bf16.mxu0 %v693
    %936 = vmatmul.mubr.bf16.gmra.mxu0 %v762
    %v937 = vpop.f32.mrf.mxu0
    %v938 = vadd.f32 %v805, %v937
    %v939 = vpop.f32.mrf.mxu0
    %v940 = vpop.f32.mrf.mxu0
    %v941 = vadd.f32 %v805, %v940
    %v942 = vpop.f32.mrf.mxu0
    %943 = vmatprep.mubr.bf16.mxu0 %v694
    %944 = vmatmul.mubr.bf16.gmra.mxu0 %v763
    %v945 = vpop.f32.mrf.mxu0
    %v946 = vadd.f32 %v805, %v945
    %v947 = vpop.f32.mrf.mxu0
    %v948 = vpop.f32.mrf.mxu0
    %v949 = vadd.f32 %v805, %v948
    %v950 = vpop.f32.mrf.mxu0
    %951 = vmatprep.mubr.bf16.mxu0 %v695
    %952 = vmatmul.mubr.bf16.gmra.mxu0 %v764
    %v953 = vpop.f32.mrf.mxu0
    %v954 = vadd.f32 %v805, %v953
    %v955 = vpop.f32.mrf.mxu0
    %v956 = vpop.f32.mrf.mxu0
    %v957 = vadd.f32 %v805, %v956
    %v958 = vpop.f32.mrf.mxu0
    %959 = vmatprep.mubr.bf16.mxu0 %v696
    %960 = vmatmul.mubr.bf16.gmra.mxu0 %v765
    %v961 = vpop.f32.mrf.mxu0
    %v962 = vadd.f32 %v805, %v961
    %v963 = vpop.f32.mrf.mxu0
    %v964 = vpop.f32.mrf.mxu0
    %v965 = vadd.f32 %v805, %v964
    %v966 = vpop.f32.mrf.mxu0
    %967 = vdwg.mxu0
    %968 = vst [vmem:[#allocation8] sm:$0xff] %v938
    %969 = vst [vmem:[#allocation8 + $0x8] sm:$0xff] %v941
    %970 = vst [vmem:[#allocation8 + $0x10] sm:$0xff] %v946
    %971 = vst [vmem:[#allocation8 + $0x18] sm:$0xff] %v949
    %972 = vst [vmem:[#allocation8 + $0x20] sm:$0xff] %v954
    %973 = vst [vmem:[#allocation8 + $0x28] sm:$0xff] %v957
    %974 = vst [vmem:[#allocation8 + $0x30] sm:$0xff] %v962
    %975 = vst [vmem:[#allocation8 + $0x38] sm:$0xff] %v965
    // Predicated region
    $region30: #{tpu_custom_call.1} parent=1 // pred_check
      _
    $region31: #{tpu_custom_call.1} parent=1 // pred_check_branch
      %977 = sbr.rel (0) target = $region33
    $region32: #{tpu_custom_call.1} parent=1 // pred_region
      %s979 = ssub.s32 1024, 1024
      %980 = vsyncadd [#allocation4], %s979
      %s981 = sshll.u32 [#allocation8], 4
      %s982 = int_to_ptr.vmem [resolvable:$true] %s981
      %987 = dma.vmem_to_hbm [thread:$0]  %s982, 1024, %s4, [#allocation4], 128, 128, 8
    $region33: #{tpu_custom_call.1} parent=1 // pred_fallthru
      _
    // Predicated region
    $region34: #{tpu_custom_call.1} parent=1 // pred_check
      _
    $region35: #{tpu_custom_call.1} parent=1 // pred_check_branch
      %989 = sbr.rel (0) target = $region37
    $region36: #{tpu_custom_call.1} parent=1 // pred_region
      %990 = dma.done [#allocation4], 1024
    $region37: #{tpu_custom_call.1} parent=1 // pred_fallthru
      _
    %991 = vsyncpa [#allocation3], 1
    %992 = vsyncpa [#allocation6], 1
    %993 = vsyncpa [#allocation4], 1

</llo_original>
